<compile_context>
chip_gen: v7x
topology: tpu7x:2x2x1
jax: 0.10.0
libtpu: 0.0.40
codegen_flags: <defaults>
</compile_context>

<pallas_src>
import functools

import jax
import jax.numpy as jnp
from jax import lax
from jax.experimental import pallas as pl
from jax.experimental.pallas import tpu as pltpu


def _round_up(x, m):
    return ((x + m - 1) // m) * m


def _linear_kernel(x_ref, w_ref, o_ref, acc_ref):
    # x_ref  : (tm, tk)  tile of the input
    # w_ref  : (tn, tk)  tile of the weight in PyTorch (dim_out, dim_in) layout
    # o_ref  : (tm, tn)  output tile (resident across the K grid axis)
    # acc_ref: (tm, tn)  f32 accumulator scratch
    k = pl.program_id(2)

    @pl.when(k == 0)
    def _():
        acc_ref[...] = jnp.zeros_like(acc_ref)

    # acc += x @ W^T : contract dim_in (axis 1) of both tiles on the MXU.
    acc_ref[...] += lax.dot_general(
        x_ref[...],
        w_ref[...],
        dimension_numbers=(((1,), (1,)), ((), ())),
        preferred_element_type=jnp.float32,
    )

    @pl.when(k == pl.num_programs(2) - 1)
    def _():
        o_ref[...] = acc_ref[...].astype(o_ref.dtype)


@functools.partial(jax.jit, static_argnames=("tm", "tn", "tk"))
def linear_pallas(x, weight, *, tm=256, tn=256, tk=512):
    """y = x @ weight.T  (nn.Linear, bias=False).

    x      : (..., dim_in)   — features on the last axis (PyTorch convention)
    weight : (dim_out, dim_in) — native PyTorch layout, NOT transposed here
    returns: (..., dim_out)
    """
    orig_shape = x.shape
    K = orig_shape[-1]
    N, K2 = weight.shape
    assert K == K2, "dim_in mismatch between x and weight"

    x2 = x.reshape(-1, K)
    M = x2.shape[0]

    # Effective tile sizes, clamped to the (padded) problem and respecting
    # TPU layout rules: sublane dims multiple of 8, lane dims multiple of 128.
    tm_e = min(tm, _round_up(M, 8))
    tn_e = min(tn, _round_up(N, 128))   # keep output last dim lane-dense
    tk_e = min(tk, _round_up(K, 128))

    M_p = _round_up(M, tm_e)
    N_p = _round_up(N, tn_e)
    K_p = _round_up(K, tk_e)

    if (M_p, K_p) != (M, K):
        x2 = jnp.pad(x2, ((0, M_p - M), (0, K_p - K)))
    w = weight
    if (N_p, K_p) != (N, K):
        w = jnp.pad(w, ((0, N_p - N), (0, K_p - K)))

    grid = (M_p // tm_e, N_p // tn_e, K_p // tk_e)
    itemsize = jnp.dtype(x.dtype).itemsize

    out = pl.pallas_call(
        _linear_kernel,
        out_shape=jax.ShapeDtypeStruct((M_p, N_p), x.dtype),
        grid_spec=pltpu.PrefetchScalarGridSpec(
            num_scalar_prefetch=0,
            grid=grid,
            in_specs=[
                # x tile: rows follow i, K-chunks follow k.
                pl.BlockSpec((tm_e, tk_e), lambda i, j, k: (i, k)),
                # weight tile in (dim_out, dim_in) layout: rows follow j.
                pl.BlockSpec((tn_e, tk_e), lambda i, j, k: (j, k)),
            ],
            out_specs=pl.BlockSpec((tm_e, tn_e), lambda i, j, k: (i, j)),
            scratch_shapes=[pltpu.VMEM((tm_e, tn_e), jnp.float32)],
        ),
        compiler_params=pltpu.CompilerParams(
            dimension_semantics=("parallel", "parallel", "arbitrary"),
        ),
        cost_estimate=pl.CostEstimate(
            flops=2 * M_p * N_p * K_p,
            transcendentals=0,
            bytes_accessed=(M_p * K_p + N_p * K_p + M_p * N_p) * itemsize,
        ),
    )(x2, w)

    out = out[:M, :N]
    return out.reshape(*orig_shape[:-1], N)


def _make_weight(key, dim_out, dim_in, dtype=jnp.float32):
    # Deterministic kaiming-uniform-like init, matching nn.Linear defaults.
    bound = 1.0 / (dim_in ** 0.5)
    return jax.random.uniform(
        key, (dim_out, dim_in), dtype=dtype, minval=-bound, maxval=bound
    )


if __name__ == "__main__":
    key = jax.random.PRNGKey(0)
    k1, k2, k3, k4 = jax.random.split(key, 4)

    # --- Test 1: small, ragged shapes (exercise the padding path). ---------
    M1, din1, dout1 = 200, 96, 160
    x1 = jax.random.normal(k1, (M1, din1), dtype=jnp.float32)
    w1 = _make_weight(k2, dout1, din1)
    y1 = jax.block_until_ready(linear_pallas(x1, w1))
    y1_ref = x1 @ w1.T
    assert y1.shape == (M1, dout1)
    assert jnp.allclose(y1, y1_ref, atol=1e-4, rtol=1e-5)

    # --- Test 2: shapes that exercise all three grid axes (2 x 2 x 2). -----
    M2, din2, dout2 = 512, 1024, 384
    x2 = jax.random.normal(k3, (M2, din2), dtype=jnp.float32)
    w2 = _make_weight(k4, dout2, din2)
    y2 = jax.block_until_ready(linear_pallas(x2, w2))
    y2_ref = x2 @ w2.T
    assert y2.shape == (M2, dout2)
    assert jnp.allclose(y2, y2_ref, atol=2e-4, rtol=2e-5)

    # TODO(synk): optionally cast tiles to bf16 inside the kernel on v6e/v7x
    # when the caller can tolerate reduced precision (keeps f32 accumulator).

    print("KERNEL_OK")
</pallas_src>

<mosaic_0001>
module attributes {stable_mosaic.version = 11 : i64} {
  func.func @_linear_kernel(%arg0: i32, %arg1: i32, %arg2: i32, %arg3: memref<200x128xf32, #tpu.memory_space<vmem>>, %arg4: memref<256x128xf32, #tpu.memory_space<vmem>>, %arg5: memref<200x256xf32, #tpu.memory_space<vmem>>, %arg6: memref<200x256xf32, #tpu.memory_space<vmem>>) attributes {dimension_semantics = [#tpu.dimension_semantics<parallel>, #tpu.dimension_semantics<parallel>, #tpu.dimension_semantics<arbitrary>], iteration_bounds = array<i64: 1, 1, 1>, scalar_prefetch = 0 : i64, scratch_operands = 1 : i64, tpu.core_type = #tpu.core_type<tc>, window_params = [{transform_indices = @transform_0, window_bounds = array<i64: 200, 128>}, {transform_indices = @transform_1, window_bounds = array<i64: 256, 128>}, {transform_indices = @transform_2, window_bounds = array<i64: 200, 256>}]} {
    %c0_i32 = arith.constant 0 : i32
    %0 = arith.cmpi eq, %arg2, %c0_i32 : i32
    %1 = arith.extui %0 : i1 to i32
    %c0_i32_0 = arith.constant 0 : i32
    %2 = arith.cmpi ne, %1, %c0_i32_0 : i32
    scf.if %2 {
      %cst_10 = arith.constant 0.000000e+00 : f32
      %12 = vector.broadcast %cst_10 : f32 to vector<200x256xf32>
      %c0_11 = arith.constant 0 : index
      %c0_12 = arith.constant 0 : index
      %13 = vector.load %arg6[%c0_11, %c0_12] : memref<200x256xf32, #tpu.memory_space<vmem>>, vector<200x256xf32>
      tpu.vector_store %arg6[%c0_11, %c0_12], %12 {strides = array<i32>} : memref<200x256xf32, #tpu.memory_space<vmem>>, vector<200x256xf32>,
    } else {
    }
    %c0 = arith.constant 0 : index
    %c0_1 = arith.constant 0 : index
    %3 = vector.load %arg6[%c0, %c0_1] : memref<200x256xf32, #tpu.memory_space<vmem>>, vector<200x256xf32>
    %c0_2 = arith.constant 0 : index
    %c0_3 = arith.constant 0 : index
    %4 = vector.load %arg3[%c0_2, %c0_3] : memref<200x128xf32, #tpu.memory_space<vmem>>, vector<200x128xf32>
    %c0_4 = arith.constant 0 : index
    %c0_5 = arith.constant 0 : index
    %5 = vector.load %arg4[%c0_4, %c0_5] : memref<256x128xf32, #tpu.memory_space<vmem>>, vector<256x128xf32>
    %cst = arith.constant dense<0.000000e+00> : vector<200x256xf32>
    %6 = tpu.matmul %4, %5, %cst {dimension_numbers = #tpu.dot_dimension_numbers<[1], [1], [0], [0], [0, 0, 1, 0], [], []>} : vector<200x128xf32>, vector<256x128xf32>, vector<200x256xf32> -> vector<200x256xf32>
    %7 = arith.addf %3, %6 : vector<200x256xf32>
    %c0_6 = arith.constant 0 : index
    %c0_7 = arith.constant 0 : index
    %8 = vector.load %arg6[%c0_6, %c0_7] : memref<200x256xf32, #tpu.memory_space<vmem>>, vector<200x256xf32>
    tpu.vector_store %arg6[%c0_6, %c0_7], %7 {strides = array<i32>} : memref<200x256xf32, #tpu.memory_space<vmem>>, vector<200x256xf32>,
    %c0_i32_8 = arith.constant 0 : i32
    %9 = arith.cmpi eq, %arg2, %c0_i32_8 : i32
    %10 = arith.extui %9 : i1 to i32
    %c0_i32_9 = arith.constant 0 : i32
    %11 = arith.cmpi ne, %10, %c0_i32_9 : i32
    scf.if %11 {
      %c0_10 = arith.constant 0 : index
      %c0_11 = arith.constant 0 : index
      %12 = vector.load %arg6[%c0_10, %c0_11] : memref<200x256xf32, #tpu.memory_space<vmem>>, vector<200x256xf32>
      %c0_12 = arith.constant 0 : index
      %c0_13 = arith.constant 0 : index
      %13 = vector.load %arg5[%c0_12, %c0_13] : memref<200x256xf32, #tpu.memory_space<vmem>>, vector<200x256xf32>
      tpu.vector_store %arg5[%c0_12, %c0_13], %12 {strides = array<i32>} : memref<200x256xf32, #tpu.memory_space<vmem>>, vector<200x256xf32>,
    } else {
    }
    return
  }
  func.func @transform_0(%arg0: i32, %arg1: i32, %arg2: i32) -> (i32, i32) {
    %c0_i32 = arith.constant 0 : i32
    return %arg0, %arg2 : i32, i32
  }
  func.func @transform_1(%arg0: i32, %arg1: i32, %arg2: i32) -> (i32, i32) {
    %c0_i32 = arith.constant 0 : i32
    return %arg1, %arg2 : i32, i32
  }
  func.func @transform_2(%arg0: i32, %arg1: i32, %arg2: i32) -> (i32, i32) {
    %c0_i32 = arith.constant 0 : i32
    return %arg0, %arg1 : i32, i32
  }
}

</mosaic_0001>

<llo_original>
// kernel: linear_pallas.1
$region0: #{linear_pallas.1}
  #allocation0 [shape = 'u32[]', space=smem, size = 0x4, offset = 0x4, fixed_abs, tag = 'smem constant byte address 0x4 - core index']
  #allocation1 [shape = 'u32[144,128]{1,0:T(1,128)}', space=vmem, size = 0x12000, scoped, tag = 'internal scratch']
  #allocation2 [shape = 'f32[200,256]{1,0:T(8,128)}', space=vmem, size = 0x32000, scoped, tag = 'scratch operand']
  %s0 = inlined_call_operand.vmem [shape: f32[200,128], index: 0, kind: input, shape index: {}]
  %s1 = inlined_call_operand.vmem [shape: f32[256,128], index: 1, kind: input, shape index: {}]
  %s2 = inlined_call_operand.vmem [shape: f32[200,256], index: 2, kind: output, shape index: {}]
  %s3 = sld [smem:[#allocation0]]
  $region26: #{linear_pallas.1} parent=0
    _
  %s5 = ssub.s32 1, %s3
  %s6 = scalar_select 0, %s5, %s3
  // Predicated region
  $region2: #{linear_pallas.1} parent=0 // pred_check
    _
  $region3: #{linear_pallas.1} parent=0 // pred_check_branch
    %8 = sbr.rel (0) target = $region5
  $region4: #{linear_pallas.1} parent=0 // pred_region
    _
  $region5: #{linear_pallas.1} parent=0 // pred_fallthru
    _
  // Predicated region
  $region6: #{linear_pallas.1} parent=0 // pred_check
    _
  $region7: #{linear_pallas.1} parent=0 // pred_check_branch
    %10 = sbr.rel (0) target = $region9
  $region8: #{linear_pallas.1} parent=0 // pred_region
    _
  $region9: #{linear_pallas.1} parent=0 // pred_fallthru
    _
  %p11 = scmp.eq.s32.totalorder 0, 0
  // Predicated region
  $region10: #{linear_pallas.1} parent=0 // pred_check
    %p12 = pneg %p11
  $region11: #{linear_pallas.1} parent=0 // pred_check_branch
    %14 = sbr.rel (%p12) target = $region13
  $region12: #{linear_pallas.1} parent=0 // pred_region
    %15 = vst [vmem:[#allocation2] sm:$0xff] 0.0
    %16 = vst [vmem:[#allocation2 + $0x8] sm:$0xff] 0.0
    %17 = vst [vmem:[#allocation2 + $0x10] sm:$0xff] 0.0
    %18 = vst [vmem:[#allocation2 + $0x18] sm:$0xff] 0.0
    %19 = vst [vmem:[#allocation2 + $0x20] sm:$0xff] 0.0
    %20 = vst [vmem:[#allocation2 + $0x28] sm:$0xff] 0.0
    %21 = vst [vmem:[#allocation2 + $0x30] sm:$0xff] 0.0
    %22 = vst [vmem:[#allocation2 + $0x38] sm:$0xff] 0.0
    %23 = vst [vmem:[#allocation2 + $0x40] sm:$0xff] 0.0
    %24 = vst [vmem:[#allocation2 + $0x48] sm:$0xff] 0.0
    %25 = vst [vmem:[#allocation2 + $0x50] sm:$0xff] 0.0
    %26 = vst [vmem:[#allocation2 + $0x58] sm:$0xff] 0.0
    %27 = vst [vmem:[#allocation2 + $0x60] sm:$0xff] 0.0
    %28 = vst [vmem:[#allocation2 + $0x68] sm:$0xff] 0.0
    %29 = vst [vmem:[#allocation2 + $0x70] sm:$0xff] 0.0
    %30 = vst [vmem:[#allocation2 + $0x78] sm:$0xff] 0.0
    %31 = vst [vmem:[#allocation2 + $0x80] sm:$0xff] 0.0
    %32 = vst [vmem:[#allocation2 + $0x88] sm:$0xff] 0.0
    %33 = vst [vmem:[#allocation2 + $0x90] sm:$0xff] 0.0
    %34 = vst [vmem:[#allocation2 + $0x98] sm:$0xff] 0.0
    %35 = vst [vmem:[#allocation2 + $0xa0] sm:$0xff] 0.0
    %36 = vst [vmem:[#allocation2 + $0xa8] sm:$0xff] 0.0
    %37 = vst [vmem:[#allocation2 + $0xb0] sm:$0xff] 0.0
    %38 = vst [vmem:[#allocation2 + $0xb8] sm:$0xff] 0.0
    %39 = vst [vmem:[#allocation2 + $0xc0] sm:$0xff] 0.0
    %40 = vst [vmem:[#allocation2 + $0xc8] sm:$0xff] 0.0
    %41 = vst [vmem:[#allocation2 + $0xd0] sm:$0xff] 0.0
    %42 = vst [vmem:[#allocation2 + $0xd8] sm:$0xff] 0.0
    %43 = vst [vmem:[#allocation2 + $0xe0] sm:$0xff] 0.0
    %44 = vst [vmem:[#allocation2 + $0xe8] sm:$0xff] 0.0
    %45 = vst [vmem:[#allocation2 + $0xf0] sm:$0xff] 0.0
    %46 = vst [vmem:[#allocation2 + $0xf8] sm:$0xff] 0.0
    %47 = vst [vmem:[#allocation2 + $0x100] sm:$0xff] 0.0
    %48 = vst [vmem:[#allocation2 + $0x108] sm:$0xff] 0.0
    %49 = vst [vmem:[#allocation2 + $0x110] sm:$0xff] 0.0
    %50 = vst [vmem:[#allocation2 + $0x118] sm:$0xff] 0.0
    %51 = vst [vmem:[#allocation2 + $0x120] sm:$0xff] 0.0
    %52 = vst [vmem:[#allocation2 + $0x128] sm:$0xff] 0.0
    %53 = vst [vmem:[#allocation2 + $0x130] sm:$0xff] 0.0
    %54 = vst [vmem:[#allocation2 + $0x138] sm:$0xff] 0.0
    %55 = vst [vmem:[#allocation2 + $0x140] sm:$0xff] 0.0
    %56 = vst [vmem:[#allocation2 + $0x148] sm:$0xff] 0.0
    %57 = vst [vmem:[#allocation2 + $0x150] sm:$0xff] 0.0
    %58 = vst [vmem:[#allocation2 + $0x158] sm:$0xff] 0.0
    %59 = vst [vmem:[#allocation2 + $0x160] sm:$0xff] 0.0
    %60 = vst [vmem:[#allocation2 + $0x168] sm:$0xff] 0.0
    %61 = vst [vmem:[#allocation2 + $0x170] sm:$0xff] 0.0
    %62 = vst [vmem:[#allocation2 + $0x178] sm:$0xff] 0.0
    %63 = vst [vmem:[#allocation2 + $0x180] sm:$0xff] 0.0
    %64 = vst [vmem:[#allocation2 + $0x188] sm:$0xff] 0.0
  $region13: #{linear_pallas.1} parent=0 // pred_fallthru
    _
  %v65 = vld [vmem:[#allocation2] sm:$0xff]
  %v66 = vld [vmem:[#allocation2 + $0x8] sm:$0xff]
  %v67 = vld [vmem:[#allocation2 + $0x10] sm:$0xff]
  %v68 = vld [vmem:[#allocation2 + $0x18] sm:$0xff]
  %v69 = vld [vmem:[#allocation2 + $0x20] sm:$0xff]
  %v70 = vld [vmem:[#allocation2 + $0x28] sm:$0xff]
  %v71 = vld [vmem:[#allocation2 + $0x30] sm:$0xff]
  %v72 = vld [vmem:[#allocation2 + $0x38] sm:$0xff]
  %v73 = vld [vmem:[#allocation2 + $0x40] sm:$0xff]
  %v74 = vld [vmem:[#allocation2 + $0x48] sm:$0xff]
  %v75 = vld [vmem:[#allocation2 + $0x50] sm:$0xff]
  %v76 = vld [vmem:[#allocation2 + $0x58] sm:$0xff]
  %v77 = vld [vmem:[#allocation2 + $0x60] sm:$0xff]
  %v78 = vld [vmem:[#allocation2 + $0x68] sm:$0xff]
  %v79 = vld [vmem:[#allocation2 + $0x70] sm:$0xff]
  %v80 = vld [vmem:[#allocation2 + $0x78] sm:$0xff]
  %v81 = vld [vmem:[#allocation2 + $0x80] sm:$0xff]
  %v82 = vld [vmem:[#allocation2 + $0x88] sm:$0xff]
  %v83 = vld [vmem:[#allocation2 + $0x90] sm:$0xff]
  %v84 = vld [vmem:[#allocation2 + $0x98] sm:$0xff]
  %v85 = vld [vmem:[#allocation2 + $0xa0] sm:$0xff]
  %v86 = vld [vmem:[#allocation2 + $0xa8] sm:$0xff]
  %v87 = vld [vmem:[#allocation2 + $0xb0] sm:$0xff]
  %v88 = vld [vmem:[#allocation2 + $0xb8] sm:$0xff]
  %v89 = vld [vmem:[#allocation2 + $0xc0] sm:$0xff]
  %v90 = vld [vmem:[#allocation2 + $0xc8] sm:$0xff]
  %v91 = vld [vmem:[#allocation2 + $0xd0] sm:$0xff]
  %v92 = vld [vmem:[#allocation2 + $0xd8] sm:$0xff]
  %v93 = vld [vmem:[#allocation2 + $0xe0] sm:$0xff]
  %v94 = vld [vmem:[#allocation2 + $0xe8] sm:$0xff]
  %v95 = vld [vmem:[#allocation2 + $0xf0] sm:$0xff]
  %v96 = vld [vmem:[#allocation2 + $0xf8] sm:$0xff]
  %v97 = vld [vmem:[#allocation2 + $0x100] sm:$0xff]
  %v98 = vld [vmem:[#allocation2 + $0x108] sm:$0xff]
  %v99 = vld [vmem:[#allocation2 + $0x110] sm:$0xff]
  %v100 = vld [vmem:[#allocation2 + $0x118] sm:$0xff]
  %v101 = vld [vmem:[#allocation2 + $0x120] sm:$0xff]
  %v102 = vld [vmem:[#allocation2 + $0x128] sm:$0xff]
  %v103 = vld [vmem:[#allocation2 + $0x130] sm:$0xff]
  %v104 = vld [vmem:[#allocation2 + $0x138] sm:$0xff]
  %v105 = vld [vmem:[#allocation2 + $0x140] sm:$0xff]
  %v106 = vld [vmem:[#allocation2 + $0x148] sm:$0xff]
  %v107 = vld [vmem:[#allocation2 + $0x150] sm:$0xff]
  %v108 = vld [vmem:[#allocation2 + $0x158] sm:$0xff]
  %v109 = vld [vmem:[#allocation2 + $0x160] sm:$0xff]
  %v110 = vld [vmem:[#allocation2 + $0x168] sm:$0xff]
  %v111 = vld [vmem:[#allocation2 + $0x170] sm:$0xff]
  %v112 = vld [vmem:[#allocation2 + $0x178] sm:$0xff]
  %v113 = vld [vmem:[#allocation2 + $0x180] sm:$0xff]
  %v114 = vld [vmem:[#allocation2 + $0x188] sm:$0xff]
  %v115 = vld [vmem:[%s0] sm:$0xff]
  %v116 = vld [vmem:[%s0 + $0x8] sm:$0xff]
  %v117 = vld [vmem:[%s0 + $0x10] sm:$0xff]
  %v118 = vld [vmem:[%s0 + $0x18] sm:$0xff]
  %v119 = vld [vmem:[%s0 + $0x20] sm:$0xff]
  %v120 = vld [vmem:[%s0 + $0x28] sm:$0xff]
  %v121 = vld [vmem:[%s0 + $0x30] sm:$0xff]
  %v122 = vld [vmem:[%s0 + $0x38] sm:$0xff]
  %v123 = vld [vmem:[%s0 + $0x40] sm:$0xff]
  %v124 = vld [vmem:[%s0 + $0x48] sm:$0xff]
  %v125 = vld [vmem:[%s0 + $0x50] sm:$0xff]
  %v126 = vld [vmem:[%s0 + $0x58] sm:$0xff]
  %v127 = vld [vmem:[%s0 + $0x60] sm:$0xff]
  %v128 = vld [vmem:[%s0 + $0x68] sm:$0xff]
  %v129 = vld [vmem:[%s0 + $0x70] sm:$0xff]
  %v130 = vld [vmem:[%s0 + $0x78] sm:$0xff]
  %v131 = vld [vmem:[%s0 + $0x80] sm:$0xff]
  %v132 = vld [vmem:[%s0 + $0x88] sm:$0xff]
  %v133 = vld [vmem:[%s0 + $0x90] sm:$0xff]
  %v134 = vld [vmem:[%s0 + $0x98] sm:$0xff]
  %v135 = vld [vmem:[%s0 + $0xa0] sm:$0xff]
  %v136 = vld [vmem:[%s0 + $0xa8] sm:$0xff]
  %v137 = vld [vmem:[%s0 + $0xb0] sm:$0xff]
  %v138 = vld [vmem:[%s0 + $0xb8] sm:$0xff]
  %v139 = vld [vmem:[%s0 + $0xc0] sm:$0xff]
  %v140 = vld [vmem:[%s1] sm:$0xff]
  %v141 = vld [vmem:[%s1 + $0x8] sm:$0xff]
  %v142 = vld [vmem:[%s1 + $0x10] sm:$0xff]
  %v143 = vld [vmem:[%s1 + $0x18] sm:$0xff]
  %v144 = vld [vmem:[%s1 + $0x20] sm:$0xff]
  %v145 = vld [vmem:[%s1 + $0x28] sm:$0xff]
  %v146 = vld [vmem:[%s1 + $0x30] sm:$0xff]
  %v147 = vld [vmem:[%s1 + $0x38] sm:$0xff]
  %v148 = vld [vmem:[%s1 + $0x40] sm:$0xff]
  %v149 = vld [vmem:[%s1 + $0x48] sm:$0xff]
  %v150 = vld [vmem:[%s1 + $0x50] sm:$0xff]
  %v151 = vld [vmem:[%s1 + $0x58] sm:$0xff]
  %v152 = vld [vmem:[%s1 + $0x60] sm:$0xff]
  %v153 = vld [vmem:[%s1 + $0x68] sm:$0xff]
  %v154 = vld [vmem:[%s1 + $0x70] sm:$0xff]
  %v155 = vld [vmem:[%s1 + $0x78] sm:$0xff]
  %v156 = vld [vmem:[%s1 + $0x80] sm:$0xff]
  %v157 = vld [vmem:[%s1 + $0x88] sm:$0xff]
  %v158 = vld [vmem:[%s1 + $0x90] sm:$0xff]
  %v159 = vld [vmem:[%s1 + $0x98] sm:$0xff]
  %v160 = vld [vmem:[%s1 + $0xa0] sm:$0xff]
  %v161 = vld [vmem:[%s1 + $0xa8] sm:$0xff]
  %v162 = vld [vmem:[%s1 + $0xb0] sm:$0xff]
  %v163 = vld [vmem:[%s1 + $0xb8] sm:$0xff]
  %v164 = vld [vmem:[%s1 + $0xc0] sm:$0xff]
  %v165 = vld [vmem:[%s1 + $0xc8] sm:$0xff]
  %v166 = vld [vmem:[%s1 + $0xd0] sm:$0xff]
  %v167 = vld [vmem:[%s1 + $0xd8] sm:$0xff]
  %v168 = vld [vmem:[%s1 + $0xe0] sm:$0xff]
  %v169 = vld [vmem:[%s1 + $0xe8] sm:$0xff]
  %v170 = vld [vmem:[%s1 + $0xf0] sm:$0xff]
  %v171 = vld [vmem:[%s1 + $0xf8] sm:$0xff]
  %172 = vmatprep.subr.mxu0 0.0
  %173 = vmatpush1.xpose.msra.mxu0 %v140
  %174 = vmatprep.subr.mxu0 0.0
  %175 = vmatpush1.xpose.msra.mxu0 %v141
  %176 = vmatprep.subr.mxu0 0.0
  %177 = vmatpush1.xpose.msra.mxu0 %v142
  %178 = vmatprep.subr.mxu0 0.0
  %179 = vmatpush1.xpose.msra.mxu0 %v143
  %180 = vmatprep.subr.mxu0 0.0
  %181 = vmatpush1.xpose.msra.mxu0 %v144
  %182 = vmatprep.subr.mxu0 0.0
  %183 = vmatpush1.xpose.msra.mxu0 %v145
  %184 = vmatprep.subr.mxu0 0.0
  %185 = vmatpush1.xpose.msra.mxu0 %v146
  %186 = vmatprep.subr.mxu0 0.0
  %187 = vmatpush1.xpose.msra.mxu0 %v147
  %188 = vmatprep.subr.mxu0 0.0
  %189 = vmatpush1.xpose.msra.mxu0 %v148
  %190 = vmatprep.subr.mxu0 0.0
  %191 = vmatpush1.xpose.msra.mxu0 %v149
  %192 = vmatprep.subr.mxu0 0.0
  %193 = vmatpush1.xpose.msra.mxu0 %v150
  %194 = vmatprep.subr.mxu0 0.0
  %195 = vmatpush1.xpose.msra.mxu0 %v151
  %196 = vmatprep.subr.mxu0 0.0
  %197 = vmatpush1.xpose.msra.mxu0 %v152
  %198 = vmatprep.subr.mxu0 0.0
  %199 = vmatpush1.xpose.msra.mxu0 %v153
  %200 = vmatprep.subr.mxu0 0.0
  %201 = vmatpush1.xpose.msra.mxu0 %v154
  %202 = vmatprep.subr.mxu0 0.0
  %203 = vmatpush1.xpose.msra.mxu0 %v155
  %204 = vmatprep.subr.mxu0 0.0
  %205 = vmatpush1.xpose.msra.mxu0 %v156
  %206 = vmatprep.subr.mxu0 0.0
  %207 = vmatpush1.xpose.msra.mxu0 %v157
  %208 = vmatprep.subr.mxu0 0.0
  %209 = vmatpush1.xpose.msra.mxu0 %v158
  %210 = vmatprep.subr.mxu0 0.0
  %211 = vmatpush1.xpose.msra.mxu0 %v159
  %212 = vmatprep.subr.mxu0 0.0
  %213 = vmatpush1.xpose.msra.mxu0 %v160
  %214 = vmatprep.subr.mxu0 0.0
  %215 = vmatpush1.xpose.msra.mxu0 %v161
  %216 = vmatprep.subr.mxu0 0.0
  %217 = vmatpush1.xpose.msra.mxu0 %v162
  %218 = vmatprep.subr.mxu0 0.0
  %219 = vmatpush1.xpose.msra.mxu0 %v163
  %220 = vmatprep.subr.mxu0 0.0
  %221 = vmatpush1.xpose.msra.mxu0 %v164
  %222 = vmatprep.subr.mxu0 0.0
  %223 = vmatpush1.xpose.msra.mxu0 %v165
  %224 = vmatprep.subr.mxu0 0.0
  %225 = vmatpush1.xpose.msra.mxu0 %v166
  %226 = vmatprep.subr.mxu0 0.0
  %227 = vmatpush1.xpose.msra.mxu0 %v167
  %228 = vmatprep.subr.mxu0 0.0
  %229 = vmatpush1.xpose.msra.mxu0 %v168
  %230 = vmatprep.subr.mxu0 0.0
  %231 = vmatpush1.xpose.msra.mxu0 %v169
  %232 = vmatprep.subr.mxu0 0.0
  %233 = vmatpush1.xpose.msra.mxu0 %v170
  %234 = vmatprep.subr.mxu0 0.0
  %235 = vmatpush1.xpose.msra.mxu0 %v171
  %236 = vmatprep.mubr.f32.mxu0 0.0
  %237 = vmatmul.mubr.f32.gmra.mrb[0].mxu0 %v115
  %v238 = vpop.f32.mrb[0].mxu0
  %v239 = vadd.f32 0.0, %v238
  %v240 = vpop.f32.mrb[0].mxu0
  %v241 = vadd.f32 0.0, %v240
  %242 = vmatprep.mubr.f32.mxu0 0.0
  %243 = vmatmul.mubr.f32.gmra.mrb[0].mxu0 %v116
  %v244 = vpop.f32.mrb[0].mxu0
  %v245 = vadd.f32 0.0, %v244
  %v246 = vpop.f32.mrb[0].mxu0
  %v247 = vadd.f32 0.0, %v246
  %248 = vmatprep.mubr.f32.mxu0 0.0
  %249 = vmatmul.mubr.f32.gmra.mrb[0].mxu0 %v117
  %v250 = vpop.f32.mrb[0].mxu0
  %v251 = vadd.f32 0.0, %v250
  %v252 = vpop.f32.mrb[0].mxu0
  %v253 = vadd.f32 0.0, %v252
  %254 = vmatprep.mubr.f32.mxu0 0.0
  %255 = vmatmul.mubr.f32.gmra.mrb[0].mxu0 %v118
  %v256 = vpop.f32.mrb[0].mxu0
  %v257 = vadd.f32 0.0, %v256
  %v258 = vpop.f32.mrb[0].mxu0
  %v259 = vadd.f32 0.0, %v258
  %260 = vmatprep.mubr.f32.mxu0 0.0
  %261 = vmatmul.mubr.f32.gmra.mrb[0].mxu0 %v119
  %v262 = vpop.f32.mrb[0].mxu0
  %v263 = vadd.f32 0.0, %v262
  %v264 = vpop.f32.mrb[0].mxu0
  %v265 = vadd.f32 0.0, %v264
  %266 = vmatprep.mubr.f32.mxu0 0.0
  %267 = vmatmul.mubr.f32.gmra.mrb[0].mxu0 %v120
  %v268 = vpop.f32.mrb[0].mxu0
  %v269 = vadd.f32 0.0, %v268
  %v270 = vpop.f32.mrb[0].mxu0
  %v271 = vadd.f32 0.0, %v270
  %272 = vmatprep.mubr.f32.mxu0 0.0
  %273 = vmatmul.mubr.f32.gmra.mrb[0].mxu0 %v121
  %v274 = vpop.f32.mrb[0].mxu0
  %v275 = vadd.f32 0.0, %v274
  %v276 = vpop.f32.mrb[0].mxu0
  %v277 = vadd.f32 0.0, %v276
  %278 = vmatprep.mubr.f32.mxu0 0.0
  %279 = vmatmul.mubr.f32.gmra.mrb[0].mxu0 %v122
  %v280 = vpop.f32.mrb[0].mxu0
  %v281 = vadd.f32 0.0, %v280
  %v282 = vpop.f32.mrb[0].mxu0
  %v283 = vadd.f32 0.0, %v282
  %284 = vmatprep.mubr.f32.mxu0 0.0
  %285 = vmatmul.mubr.f32.gmra.mrb[0].mxu0 %v123
  %v286 = vpop.f32.mrb[0].mxu0
  %v287 = vadd.f32 0.0, %v286
  %v288 = vpop.f32.mrb[0].mxu0
  %v289 = vadd.f32 0.0, %v288
  %290 = vmatprep.mubr.f32.mxu0 0.0
  %291 = vmatmul.mubr.f32.gmra.mrb[0].mxu0 %v124
  %v292 = vpop.f32.mrb[0].mxu0
  %v293 = vadd.f32 0.0, %v292
  %v294 = vpop.f32.mrb[0].mxu0
  %v295 = vadd.f32 0.0, %v294
  %296 = vmatprep.mubr.f32.mxu0 0.0
  %297 = vmatmul.mubr.f32.gmra.mrb[0].mxu0 %v125
  %v298 = vpop.f32.mrb[0].mxu0
  %v299 = vadd.f32 0.0, %v298
  %v300 = vpop.f32.mrb[0].mxu0
  %v301 = vadd.f32 0.0, %v300
  %302 = vmatprep.mubr.f32.mxu0 0.0
  %303 = vmatmul.mubr.f32.gmra.mrb[0].mxu0 %v126
  %v304 = vpop.f32.mrb[0].mxu0
  %v305 = vadd.f32 0.0, %v304
  %v306 = vpop.f32.mrb[0].mxu0
  %v307 = vadd.f32 0.0, %v306
  %308 = vmatprep.mubr.f32.mxu0 0.0
  %309 = vmatmul.mubr.f32.gmra.mrb[0].mxu0 %v127
  %v310 = vpop.f32.mrb[0].mxu0
  %v311 = vadd.f32 0.0, %v310
  %v312 = vpop.f32.mrb[0].mxu0
  %v313 = vadd.f32 0.0, %v312
  %314 = vmatprep.mubr.f32.mxu0 0.0
  %315 = vmatmul.mubr.f32.gmra.mrb[0].mxu0 %v128
  %v316 = vpop.f32.mrb[0].mxu0
  %v317 = vadd.f32 0.0, %v316
  %v318 = vpop.f32.mrb[0].mxu0
  %v319 = vadd.f32 0.0, %v318
  %320 = vmatprep.mubr.f32.mxu0 0.0
  %321 = vmatmul.mubr.f32.gmra.mrb[0].mxu0 %v129
  %v322 = vpop.f32.mrb[0].mxu0
  %v323 = vadd.f32 0.0, %v322
  %v324 = vpop.f32.mrb[0].mxu0
  %v325 = vadd.f32 0.0, %v324
  %326 = vmatprep.mubr.f32.mxu0 0.0
  %327 = vmatmul.mubr.f32.gmra.mrb[0].mxu0 %v130
  %v328 = vpop.f32.mrb[0].mxu0
  %v329 = vadd.f32 0.0, %v328
  %v330 = vpop.f32.mrb[0].mxu0
  %v331 = vadd.f32 0.0, %v330
  %332 = vmatprep.mubr.f32.mxu0 0.0
  %333 = vmatmul.mubr.f32.gmra.mrb[0].mxu0 %v131
  %v334 = vpop.f32.mrb[0].mxu0
  %v335 = vadd.f32 0.0, %v334
  %v336 = vpop.f32.mrb[0].mxu0
  %v337 = vadd.f32 0.0, %v336
  %338 = vmatprep.mubr.f32.mxu0 0.0
  %339 = vmatmul.mubr.f32.gmra.mrb[0].mxu0 %v132
  %v340 = vpop.f32.mrb[0].mxu0
  %v341 = vadd.f32 0.0, %v340
  %v342 = vpop.f32.mrb[0].mxu0
  %v343 = vadd.f32 0.0, %v342
  %344 = vmatprep.mubr.f32.mxu0 0.0
  %345 = vmatmul.mubr.f32.gmra.mrb[0].mxu0 %v133
  %v346 = vpop.f32.mrb[0].mxu0
  %v347 = vadd.f32 0.0, %v346
  %v348 = vpop.f32.mrb[0].mxu0
  %v349 = vadd.f32 0.0, %v348
  %350 = vmatprep.mubr.f32.mxu0 0.0
  %351 = vmatmul.mubr.f32.gmra.mrb[0].mxu0 %v134
  %v352 = vpop.f32.mrb[0].mxu0
  %v353 = vadd.f32 0.0, %v352
  %v354 = vpop.f32.mrb[0].mxu0
  %v355 = vadd.f32 0.0, %v354
  %356 = vmatprep.mubr.f32.mxu0 0.0
  %357 = vmatmul.mubr.f32.gmra.mrb[0].mxu0 %v135
  %v358 = vpop.f32.mrb[0].mxu0
  %v359 = vadd.f32 0.0, %v358
  %v360 = vpop.f32.mrb[0].mxu0
  %v361 = vadd.f32 0.0, %v360
  %362 = vmatprep.mubr.f32.mxu0 0.0
  %363 = vmatmul.mubr.f32.gmra.mrb[0].mxu0 %v136
  %v364 = vpop.f32.mrb[0].mxu0
  %v365 = vadd.f32 0.0, %v364
  %v366 = vpop.f32.mrb[0].mxu0
  %v367 = vadd.f32 0.0, %v366
  %368 = vmatprep.mubr.f32.mxu0 0.0
  %369 = vmatmul.mubr.f32.gmra.mrb[0].mxu0 %v137
  %v370 = vpop.f32.mrb[0].mxu0
  %v371 = vadd.f32 0.0, %v370
  %v372 = vpop.f32.mrb[0].mxu0
  %v373 = vadd.f32 0.0, %v372
  %374 = vmatprep.mubr.f32.mxu0 0.0
  %375 = vmatmul.mubr.f32.gmra.mrb[0].mxu0 %v138
  %v376 = vpop.f32.mrb[0].mxu0
  %v377 = vadd.f32 0.0, %v376
  %v378 = vpop.f32.mrb[0].mxu0
  %v379 = vadd.f32 0.0, %v378
  %380 = vmatprep.mubr.f32.mxu0 0.0
  %381 = vmatmul.mubr.f32.gmra.mrb[0].mxu0 %v139
  %v382 = vpop.f32.mrb[0].mxu0
  %v383 = vadd.f32 0.0, %v382
  %v384 = vpop.f32.mrb[0].mxu0
  %v385 = vadd.f32 0.0, %v384
  %386 = vdwg.mxu0
  %v387 = vadd.f32 %v65, %v239
  %v388 = vadd.f32 %v66, %v241
  %v389 = vadd.f32 %v67, %v245
  %v390 = vadd.f32 %v68, %v247
  %v391 = vadd.f32 %v69, %v251
  %v392 = vadd.f32 %v70, %v253
  %v393 = vadd.f32 %v71, %v257
  %v394 = vadd.f32 %v72, %v259
  %v395 = vadd.f32 %v73, %v263
  %v396 = vadd.f32 %v74, %v265
  %v397 = vadd.f32 %v75, %v269
  %v398 = vadd.f32 %v76, %v271
  %v399 = vadd.f32 %v77, %v275
  %v400 = vadd.f32 %v78, %v277
  %v401 = vadd.f32 %v79, %v281
  %v402 = vadd.f32 %v80, %v283
  %v403 = vadd.f32 %v81, %v287
  %v404 = vadd.f32 %v82, %v289
  %v405 = vadd.f32 %v83, %v293
  %v406 = vadd.f32 %v84, %v295
  %v407 = vadd.f32 %v85, %v299
  %v408 = vadd.f32 %v86, %v301
  %v409 = vadd.f32 %v87, %v305
  %v410 = vadd.f32 %v88, %v307
  %v411 = vadd.f32 %v89, %v311
  %v412 = vadd.f32 %v90, %v313
  %v413 = vadd.f32 %v91, %v317
  %v414 = vadd.f32 %v92, %v319
  %v415 = vadd.f32 %v93, %v323
  %v416 = vadd.f32 %v94, %v325
  %v417 = vadd.f32 %v95, %v329
  %v418 = vadd.f32 %v96, %v331
  %v419 = vadd.f32 %v97, %v335
  %v420 = vadd.f32 %v98, %v337
  %v421 = vadd.f32 %v99, %v341
  %v422 = vadd.f32 %v100, %v343
  %v423 = vadd.f32 %v101, %v347
  %v424 = vadd.f32 %v102, %v349
  %v425 = vadd.f32 %v103, %v353
  %v426 = vadd.f32 %v104, %v355
  %v427 = vadd.f32 %v105, %v359
  %v428 = vadd.f32 %v106, %v361
  %v429 = vadd.f32 %v107, %v365
  %v430 = vadd.f32 %v108, %v367
  %v431 = vadd.f32 %v109, %v371
  %v432 = vadd.f32 %v110, %v373
  %v433 = vadd.f32 %v111, %v377
  %v434 = vadd.f32 %v112, %v379
  %v435 = vadd.f32 %v113, %v383
  %v436 = vadd.f32 %v114, %v385
  %437 = vst [vmem:[#allocation2] sm:$0xff] %v387
  %438 = vst [vmem:[#allocation2 + $0x8] sm:$0xff] %v388
  %439 = vst [vmem:[#allocation2 + $0x10] sm:$0xff] %v389
  %440 = vst [vmem:[#allocation2 + $0x18] sm:$0xff] %v390
  %441 = vst [vmem:[#allocation2 + $0x20] sm:$0xff] %v391
  %442 = vst [vmem:[#allocation2 + $0x28] sm:$0xff] %v392
  %443 = vst [vmem:[#allocation2 + $0x30] sm:$0xff] %v393
  %444 = vst [vmem:[#allocation2 + $0x38] sm:$0xff] %v394
  %445 = vst [vmem:[#allocation2 + $0x40] sm:$0xff] %v395
  %446 = vst [vmem:[#allocation2 + $0x48] sm:$0xff] %v396
  %447 = vst [vmem:[#allocation2 + $0x50] sm:$0xff] %v397
  %448 = vst [vmem:[#allocation2 + $0x58] sm:$0xff] %v398
  %449 = vst [vmem:[#allocation2 + $0x60] sm:$0xff] %v399
  %450 = vst [vmem:[#allocation2 + $0x68] sm:$0xff] %v400
  %451 = vst [vmem:[#allocation2 + $0x70] sm:$0xff] %v401
  %452 = vst [vmem:[#allocation2 + $0x78] sm:$0xff] %v402
  %453 = vst [vmem:[#allocation2 + $0x80] sm:$0xff] %v403
  %454 = vst [vmem:[#allocation2 + $0x88] sm:$0xff] %v404
  %455 = vst [vmem:[#allocation2 + $0x90] sm:$0xff] %v405
  %456 = vst [vmem:[#allocation2 + $0x98] sm:$0xff] %v406
  %457 = vst [vmem:[#allocation2 + $0xa0] sm:$0xff] %v407
  %458 = vst [vmem:[#allocation2 + $0xa8] sm:$0xff] %v408
  %459 = vst [vmem:[#allocation2 + $0xb0] sm:$0xff] %v409
  %460 = vst [vmem:[#allocation2 + $0xb8] sm:$0xff] %v410
  %461 = vst [vmem:[#allocation2 + $0xc0] sm:$0xff] %v411
  %462 = vst [vmem:[#allocation2 + $0xc8] sm:$0xff] %v412
  %463 = vst [vmem:[#allocation2 + $0xd0] sm:$0xff] %v413
  %464 = vst [vmem:[#allocation2 + $0xd8] sm:$0xff] %v414
  %465 = vst [vmem:[#allocation2 + $0xe0] sm:$0xff] %v415
  %466 = vst [vmem:[#allocation2 + $0xe8] sm:$0xff] %v416
  %467 = vst [vmem:[#allocation2 + $0xf0] sm:$0xff] %v417
  %468 = vst [vmem:[#allocation2 + $0xf8] sm:$0xff] %v418
  %469 = vst [vmem:[#allocation2 + $0x100] sm:$0xff] %v419
  %470 = vst [vmem:[#allocation2 + $0x108] sm:$0xff] %v420
  %471 = vst [vmem:[#allocation2 + $0x110] sm:$0xff] %v421
  %472 = vst [vmem:[#allocation2 + $0x118] sm:$0xff] %v422
  %473 = vst [vmem:[#allocation2 + $0x120] sm:$0xff] %v423
  %474 = vst [vmem:[#allocation2 + $0x128] sm:$0xff] %v424
  %475 = vst [vmem:[#allocation2 + $0x130] sm:$0xff] %v425
  %476 = vst [vmem:[#allocation2 + $0x138] sm:$0xff] %v426
  %477 = vst [vmem:[#allocation2 + $0x140] sm:$0xff] %v427
  %478 = vst [vmem:[#allocation2 + $0x148] sm:$0xff] %v428
  %479 = vst [vmem:[#allocation2 + $0x150] sm:$0xff] %v429
  %480 = vst [vmem:[#allocation2 + $0x158] sm:$0xff] %v430
  %481 = vst [vmem:[#allocation2 + $0x160] sm:$0xff] %v431
  %482 = vst [vmem:[#allocation2 + $0x168] sm:$0xff] %v432
  %483 = vst [vmem:[#allocation2 + $0x170] sm:$0xff] %v433
  %484 = vst [vmem:[#allocation2 + $0x178] sm:$0xff] %v434
  %485 = vst [vmem:[#allocation2 + $0x180] sm:$0xff] %v435
  %486 = vst [vmem:[#allocation2 + $0x188] sm:$0xff] %v436
  // Predicated region
  $region14: #{linear_pallas.1} parent=0 // pred_check
    %p487 = pneg %p11
  $region15: #{linear_pallas.1} parent=0 // pred_check_branch
    %489 = sbr.rel (%p487) target = $region17
  $region16: #{linear_pallas.1} parent=0 // pred_region
    %v490 = vld [vmem:[#allocation2] sm:$0xff]
    %v491 = vld [vmem:[#allocation2 + $0x8] sm:$0xff]
    %v492 = vld [vmem:[#allocation2 + $0x10] sm:$0xff]
    %v493 = vld [vmem:[#allocation2 + $0x18] sm:$0xff]
    %v494 = vld [vmem:[#allocation2 + $0x20] sm:$0xff]
    %v495 = vld [vmem:[#allocation2 + $0x28] sm:$0xff]
    %v496 = vld [vmem:[#allocation2 + $0x30] sm:$0xff]
    %v497 = vld [vmem:[#allocation2 + $0x38] sm:$0xff]
    %v498 = vld [vmem:[#allocation2 + $0x40] sm:$0xff]
    %v499 = vld [vmem:[#allocation2 + $0x48] sm:$0xff]
    %v500 = vld [vmem:[#allocation2 + $0x50] sm:$0xff]
    %v501 = vld [vmem:[#allocation2 + $0x58] sm:$0xff]
    %v502 = vld [vmem:[#allocation2 + $0x60] sm:$0xff]
    %v503 = vld [vmem:[#allocation2 + $0x68] sm:$0xff]
    %v504 = vld [vmem:[#allocation2 + $0x70] sm:$0xff]
    %v505 = vld [vmem:[#allocation2 + $0x78] sm:$0xff]
    %v506 = vld [vmem:[#allocation2 + $0x80] sm:$0xff]
    %v507 = vld [vmem:[#allocation2 + $0x88] sm:$0xff]
    %v508 = vld [vmem:[#allocation2 + $0x90] sm:$0xff]
    %v509 = vld [vmem:[#allocation2 + $0x98] sm:$0xff]
    %v510 = vld [vmem:[#allocation2 + $0xa0] sm:$0xff]
    %v511 = vld [vmem:[#allocation2 + $0xa8] sm:$0xff]
    %v512 = vld [vmem:[#allocation2 + $0xb0] sm:$0xff]
    %v513 = vld [vmem:[#allocation2 + $0xb8] sm:$0xff]
    %v514 = vld [vmem:[#allocation2 + $0xc0] sm:$0xff]
    %v515 = vld [vmem:[#allocation2 + $0xc8] sm:$0xff]
    %v516 = vld [vmem:[#allocation2 + $0xd0] sm:$0xff]
    %v517 = vld [vmem:[#allocation2 + $0xd8] sm:$0xff]
    %v518 = vld [vmem:[#allocation2 + $0xe0] sm:$0xff]
    %v519 = vld [vmem:[#allocation2 + $0xe8] sm:$0xff]
    %v520 = vld [vmem:[#allocation2 + $0xf0] sm:$0xff]
    %v521 = vld [vmem:[#allocation2 + $0xf8] sm:$0xff]
    %v522 = vld [vmem:[#allocation2 + $0x100] sm:$0xff]
    %v523 = vld [vmem:[#allocation2 + $0x108] sm:$0xff]
    %v524 = vld [vmem:[#allocation2 + $0x110] sm:$0xff]
    %v525 = vld [vmem:[#allocation2 + $0x118] sm:$0xff]
    %v526 = vld [vmem:[#allocation2 + $0x120] sm:$0xff]
    %v527 = vld [vmem:[#allocation2 + $0x128] sm:$0xff]
    %v528 = vld [vmem:[#allocation2 + $0x130] sm:$0xff]
    %v529 = vld [vmem:[#allocation2 + $0x138] sm:$0xff]
    %v530 = vld [vmem:[#allocation2 + $0x140] sm:$0xff]
    %v531 = vld [vmem:[#allocation2 + $0x148] sm:$0xff]
    %v532 = vld [vmem:[#allocation2 + $0x150] sm:$0xff]
    %v533 = vld [vmem:[#allocation2 + $0x158] sm:$0xff]
    %v534 = vld [vmem:[#allocation2 + $0x160] sm:$0xff]
    %v535 = vld [vmem:[#allocation2 + $0x168] sm:$0xff]
    %v536 = vld [vmem:[#allocation2 + $0x170] sm:$0xff]
    %v537 = vld [vmem:[#allocation2 + $0x178] sm:$0xff]
    %v538 = vld [vmem:[#allocation2 + $0x180] sm:$0xff]
    %v539 = vld [vmem:[#allocation2 + $0x188] sm:$0xff]
    %540 = vst [vmem:[%s2] sm:$0xff] %v490
    %541 = vst [vmem:[%s2 + $0x8] sm:$0xff] %v491
    %542 = vst [vmem:[%s2 + $0x10] sm:$0xff] %v492
    %543 = vst [vmem:[%s2 + $0x18] sm:$0xff] %v493
    %544 = vst [vmem:[%s2 + $0x20] sm:$0xff] %v494
    %545 = vst [vmem:[%s2 + $0x28] sm:$0xff] %v495
    %546 = vst [vmem:[%s2 + $0x30] sm:$0xff] %v496
    %547 = vst [vmem:[%s2 + $0x38] sm:$0xff] %v497
    %548 = vst [vmem:[%s2 + $0x40] sm:$0xff] %v498
    %549 = vst [vmem:[%s2 + $0x48] sm:$0xff] %v499
    %550 = vst [vmem:[%s2 + $0x50] sm:$0xff] %v500
    %551 = vst [vmem:[%s2 + $0x58] sm:$0xff] %v501
    %552 = vst [vmem:[%s2 + $0x60] sm:$0xff] %v502
    %553 = vst [vmem:[%s2 + $0x68] sm:$0xff] %v503
    %554 = vst [vmem:[%s2 + $0x70] sm:$0xff] %v504
    %555 = vst [vmem:[%s2 + $0x78] sm:$0xff] %v505
    %556 = vst [vmem:[%s2 + $0x80] sm:$0xff] %v506
    %557 = vst [vmem:[%s2 + $0x88] sm:$0xff] %v507
    %558 = vst [vmem:[%s2 + $0x90] sm:$0xff] %v508
    %559 = vst [vmem:[%s2 + $0x98] sm:$0xff] %v509
    %560 = vst [vmem:[%s2 + $0xa0] sm:$0xff] %v510
    %561 = vst [vmem:[%s2 + $0xa8] sm:$0xff] %v511
    %562 = vst [vmem:[%s2 + $0xb0] sm:$0xff] %v512
    %563 = vst [vmem:[%s2 + $0xb8] sm:$0xff] %v513
    %564 = vst [vmem:[%s2 + $0xc0] sm:$0xff] %v514
    %565 = vst [vmem:[%s2 + $0xc8] sm:$0xff] %v515
    %566 = vst [vmem:[%s2 + $0xd0] sm:$0xff] %v516
    %567 = vst [vmem:[%s2 + $0xd8] sm:$0xff] %v517
    %568 = vst [vmem:[%s2 + $0xe0] sm:$0xff] %v518
    %569 = vst [vmem:[%s2 + $0xe8] sm:$0xff] %v519
    %570 = vst [vmem:[%s2 + $0xf0] sm:$0xff] %v520
    %571 = vst [vmem:[%s2 + $0xf8] sm:$0xff] %v521
    %572 = vst [vmem:[%s2 + $0x100] sm:$0xff] %v522
    %573 = vst [vmem:[%s2 + $0x108] sm:$0xff] %v523
    %574 = vst [vmem:[%s2 + $0x110] sm:$0xff] %v524
    %575 = vst [vmem:[%s2 + $0x118] sm:$0xff] %v525
    %576 = vst [vmem:[%s2 + $0x120] sm:$0xff] %v526
    %577 = vst [vmem:[%s2 + $0x128] sm:$0xff] %v527
    %578 = vst [vmem:[%s2 + $0x130] sm:$0xff] %v528
    %579 = vst [vmem:[%s2 + $0x138] sm:$0xff] %v529
    %580 = vst [vmem:[%s2 + $0x140] sm:$0xff] %v530
    %581 = vst [vmem:[%s2 + $0x148] sm:$0xff] %v531
    %582 = vst [vmem:[%s2 + $0x150] sm:$0xff] %v532
    %583 = vst [vmem:[%s2 + $0x158] sm:$0xff] %v533
    %584 = vst [vmem:[%s2 + $0x160] sm:$0xff] %v534
    %585 = vst [vmem:[%s2 + $0x168] sm:$0xff] %v535
    %586 = vst [vmem:[%s2 + $0x170] sm:$0xff] %v536
    %587 = vst [vmem:[%s2 + $0x178] sm:$0xff] %v537
    %588 = vst [vmem:[%s2 + $0x180] sm:$0xff] %v538
    %589 = vst [vmem:[%s2 + $0x188] sm:$0xff] %v539
  $region17: #{linear_pallas.1} parent=0 // pred_fallthru
    _
  // Predicated region
  $region18: #{linear_pallas.1} parent=0 // pred_check
    _
  $region19: #{linear_pallas.1} parent=0 // pred_check_branch
    %591 = sbr.rel (0) target = $region21
  $region20: #{linear_pallas.1} parent=0 // pred_region
    _
  $region21: #{linear_pallas.1} parent=0 // pred_fallthru
    _
  // Predicated region
  $region22: #{linear_pallas.1} parent=0 // pred_check
    _
  $region23: #{linear_pallas.1} parent=0 // pred_check_branch
    %593 = sbr.rel (0) target = $region25
  $region24: #{linear_pallas.1} parent=0 // pred_region
    _
  $region25: #{linear_pallas.1} parent=0 // pred_fallthru
    _

</llo_original>
